<compile_context>
chip_gen: v5e
topology: v5e:2x2
jax: 0.10.0
libtpu: 0.0.40
codegen_flags: <defaults>
</compile_context>

<pallas_src>
import jax
import jax.numpy as jnp
from jax import lax
from jax.experimental import pallas as pl
from jax.experimental.pallas import tpu as pltpu


# ----------------------------------------------------------------------------
# host-side helpers
# ----------------------------------------------------------------------------
# TODO(synk): the irregular bilinear gather has no clean rectangular-BlockSpec
# expression; it stays in XLA (it only touches the tiny 1-channel mask).
def bilinear_resize_align_corners(mask, out_hw):
    """F.interpolate(mask, (H, W), mode='bilinear', align_corners=True)."""
    n, c, hm, wm = mask.shape
    H, W = out_hw
    if (hm, wm) == (H, W):
        return mask

    def coords(out_len, in_len):
        if out_len == 1:
            return jnp.zeros((1,), jnp.float32)
        scale = (in_len - 1) / (out_len - 1)
        return jnp.arange(out_len, dtype=jnp.float32) * scale

    ys = coords(H, hm)
    xs = coords(W, wm)
    y0 = jnp.clip(jnp.floor(ys).astype(jnp.int32), 0, hm - 1)
    y1 = jnp.clip(y0 + 1, 0, hm - 1)
    x0 = jnp.clip(jnp.floor(xs).astype(jnp.int32), 0, wm - 1)
    x1 = jnp.clip(x0 + 1, 0, wm - 1)
    wy = (ys - y0.astype(jnp.float32))[None, None, :, None]   # (1,1,H,1)
    wx = (xs - x0.astype(jnp.float32))[None, None, None, :]   # (1,1,1,W)

    def gather(yi, xi):
        return mask[:, :, yi][:, :, :, xi]                    # (N,1,H,W)

    top = gather(y0, x0) * (1.0 - wx) + gather(y0, x1) * wx
    bot = gather(y1, x0) * (1.0 - wx) + gather(y1, x1) * wx
    return top * (1.0 - wy) + bot * wy


def _vmem_plan():
    """(working-set budget bytes, vmem_limit_bytes) derived from the chip."""
    try:
        cap = int(pltpu.get_tpu_info().vmem_capacity_bytes)
    except Exception:  # pragma: no cover - conservative (v7x-sized) fallback
        cap = 64 << 20
    budget = cap // 2                       # double-buffered working-set target
    limit = min((cap * 3) // 4, cap - (8 << 20))
    return budget, max(limit, budget + (4 << 20))


def _choose_tiles(n, c, hw, z_bytes, budget, has_mask):
    """Pick (tn batch rows, thw spatial cols) per block.

    Budget accounts for the z double-buffer, the in-kernel f32 temporaries
    (upcast + product) and the mask double-buffer.  Keeps >= 2 blocks on the
    batch ("parallel") axis whenever n >= 2 so both v7x TensorCores get work,
    and targets thw >= 512 (measured ~85% of HBM roofline) before growing tn.
    NOTE: for C below the native sublane count the (C, thw) vreg tile pads the
    sublane axis; folding C into the batch axis would remove that waste but is
    not done here (kernel is HBM-bandwidth-bound).
    """
    per_elem = c * (2 * z_bytes + 8) + (8 if has_mask else 0)
    tn = max(1, min(32, (n + 1) // 2))          # >= 2 batch blocks when n >= 2
    while tn > 1 and budget // (per_elem * tn) < min(hw, 512):
        tn //= 2                                # huge C: shrink rows, keep cols
    max_cols = max(budget // (per_elem * tn), 128)
    if hw <= max_cols:
        thw = hw                                # full spatial extent: no tail
    else:
        thw = max(128, (max_cols // 128) * 128)  # lane-dense tile, ragged tail
    return tn, thw


# ----------------------------------------------------------------------------
# kernels
# ----------------------------------------------------------------------------
def _make_masked_pool_kernel(hw, has_tail):
    """q[n, c] = sum_hw z[n, c, hw] * m_norm[n, hw]  (mask pre-normalized)."""

    def kernel(z_ref, m_ref, o_ref, acc_ref):
        j = pl.program_id(1)
        nj = pl.num_programs(1)
        thw = z_ref.shape[-1]

        @pl.when(j == 0)
        def _init():
            acc_ref[...] = jnp.zeros_like(acc_ref)

        def accumulate(mask_tail):
            z = z_ref[...].astype(jnp.float32)            # (tn, C, thw)
            m = m_ref[...]                                # (tn, 1, thw) f32
            prod = z * m                                  # broadcast over C
            if mask_tail:
                # zero out-of-bounds columns of the ragged tail block (the
                # garbage there may be NaN/Inf, so select on the product).
                col = lax.broadcasted_iota(jnp.int32, (1, 1, thw), 2)
                prod = jnp.where(j * thw + col < hw, prod, 0.0)
            acc_ref[...] += jnp.sum(prod, axis=-1)        # (tn, C)

        if has_tail:
            @pl.when(j < nj - 1)
            def _steady():
                accumulate(False)

            @pl.when(j == nj - 1)
            def _tail():
                accumulate(True)
        else:
            accumulate(False)

        @pl.when(j == nj - 1)
        def _finalize():
            o_ref[...] = acc_ref[...].reshape(o_ref.shape).astype(o_ref.dtype)

    return kernel


def _make_mean_pool_kernel(hw, has_tail):
    """q[n, c] = mean_hw z[n, c, hw]  (adaptive_avg_pool2d(z, 1)); no mask stream."""
    inv_hw = 1.0 / float(hw)

    def kernel(z_ref, o_ref, acc_ref):
        j = pl.program_id(1)
        nj = pl.num_programs(1)
        thw = z_ref.shape[-1]

        @pl.when(j == 0)
        def _init():
            acc_ref[...] = jnp.zeros_like(acc_ref)

        def accumulate(mask_tail):
            z = z_ref[...].astype(jnp.float32)            # (tn, C, thw)
            if mask_tail:
                col = lax.broadcasted_iota(jnp.int32, (1, 1, thw), 2)
                z = jnp.where(j * thw + col < hw, z, 0.0)
            acc_ref[...] += jnp.sum(z, axis=-1)           # (tn, C)

        if has_tail:
            @pl.when(j < nj - 1)
            def _steady():
                accumulate(False)

            @pl.when(j == nj - 1)
            def _tail():
                accumulate(True)
        else:
            accumulate(False)

        @pl.when(j == nj - 1)
        def _finalize():
            o_ref[...] = (acc_ref[...] * inv_hw).reshape(o_ref.shape).astype(o_ref.dtype)

    return kernel


# ----------------------------------------------------------------------------
# wrapper
# ----------------------------------------------------------------------------
def mask_query(z, weight, bias, mask=None):
    """z: (N, C, H, W) NCHW (any float dtype).  weight: (out, C) (PyTorch Linear
    layout).  bias: (out,).  Returns (N, 1, out) float32, matching MaskQuery.forward."""
    n, c, h, w = z.shape
    hw = h * w
    z3 = z.reshape(n, c, hw)                     # contiguous: metadata-only reshape

    has_mask = mask is not None
    budget, vmem_limit = _vmem_plan()
    z_bytes = jnp.dtype(z.dtype).itemsize
    tn, thw = _choose_tiles(n, c, hw, z_bytes, budget, has_mask)
    grid = (pl.cdiv(n, tn), pl.cdiv(hw, thw))
    has_tail = (hw % thw) != 0

    in_specs = [pl.BlockSpec((tn, c, thw), lambda i, j: (i, 0, j))]   # streamed z
    operands = [z3]
    if has_mask:
        m = bilinear_resize_align_corners(mask.astype(jnp.float32), (h, w))
        m = m.reshape(n, 1, hw)
        # pre-normalize so the kernel computes q = sum(z * m/sum(m)) directly
        m = m / jnp.sum(m, axis=-1, keepdims=True)
        in_specs.append(pl.BlockSpec((tn, 1, thw), lambda i, j: (i, 0, j)))
        operands.append(m)
        kernel = _make_masked_pool_kernel(hw, has_tail)
    else:
        kernel = _make_mean_pool_kernel(hw, has_tail)

    q = pl.pallas_call(
        kernel,
        out_shape=jax.ShapeDtypeStruct((n, 1, c), jnp.float32),
        grid=grid,
        in_specs=in_specs,
        out_specs=pl.BlockSpec((tn, 1, c), lambda i, j: (i, 0, 0)),
        scratch_shapes=[pltpu.VMEM((tn, c), jnp.float32)],   # f32 accumulator
        compiler_params=pltpu.CompilerParams(
            dimension_semantics=("parallel", "arbitrary"),
            vmem_limit_bytes=int(vmem_limit)),
    )(*operands)

    # Tiny (N, C) @ (C, out) Linear hoisted to XLA: frees the resident weight/bias
    # VMEM double-buffers and removes the out_channel lane padding (per review).
    out = q @ weight.T.astype(jnp.float32) + bias.astype(jnp.float32)
    return out                                   # (N, 1, out)


# ----------------------------------------------------------------------------
# pure-JAX reference + test
# ----------------------------------------------------------------------------
def _reference(z, weight, bias, mask=None):
    n, c, h, w = z.shape
    zf = z.astype(jnp.float32)
    if mask is None:
        q = jnp.mean(zf, axis=(2, 3))
    else:
        m = bilinear_resize_align_corners(mask.astype(jnp.float32), (h, w))
        q = jnp.sum(zf * m, axis=(2, 3)) / jnp.sum(m, axis=(2, 3))
    q = q @ weight.T.astype(jnp.float32) + bias.astype(jnp.float32)
    return q[:, None, :]


if __name__ == "__main__":
    key = jax.random.PRNGKey(0)
    k_z, k_m, k_w, k_b = jax.random.split(key, 4)

    N, C, H, W = 2, 4, 16, 16          # in_channel = C = 4
    OUT = 32                           # out_channel

    z = jax.random.normal(k_z, (N, C, H, W), dtype=jnp.float32)
    # mask given at a coarser resolution to exercise the bilinear resize
    mask = jax.nn.sigmoid(jax.random.normal(k_m, (N, 1, 8, 8), dtype=jnp.float32))

    # Deterministic Linear(in_channel=C, out_channel=OUT) parameters
    bound = 1.0 / (C ** 0.5)
    weight = jax.random.uniform(k_w, (OUT, C), jnp.float32, -bound, bound)
    bias = jax.random.uniform(k_b, (OUT,), jnp.float32, -bound, bound)

    # mask path
    out_mask = jax.block_until_ready(mask_query(z, weight, bias, mask))
    ref_mask = _reference(z, weight, bias, mask)
    assert out_mask.shape == (N, 1, OUT)
    assert jnp.allclose(out_mask, ref_mask, atol=1e-5, rtol=1e-5)

    # no-mask path (adaptive avg pool)
    out_avg = jax.block_until_ready(mask_query(z, weight, bias, None))
    ref_avg = _reference(z, weight, bias, None)
    assert out_avg.shape == (N, 1, OUT)
    assert jnp.allclose(out_avg, ref_avg, atol=1e-5, rtol=1e-5)

    print("KERNEL_OK")
</pallas_src>

<mosaic_0001>
module attributes {stable_mosaic.version = 11 : i64} {
  func.func @kernel(%arg0: i32, %arg1: i32, %arg2: memref<1x4x256xf32, #tpu.memory_space<vmem>>, %arg3: memref<1x1x256xf32, #tpu.memory_space<vmem>>, %arg4: memref<1x1x4xf32, #tpu.memory_space<vmem>>, %arg5: memref<1x4xf32, #tpu.memory_space<vmem>>) attributes {dimension_semantics = [#tpu.dimension_semantics<parallel>, #tpu.dimension_semantics<arbitrary>], iteration_bounds = array<i64: 2, 1>, scalar_prefetch = 0 : i64, scratch_operands = 1 : i64, tpu.core_type = #tpu.core_type<tc>, window_params = [{transform_indices = @transform_0, window_bounds = array<i64: 1, 4, 256>}, {transform_indices = @transform_1, window_bounds = array<i64: 1, 1, 256>}, {transform_indices = @transform_2, window_bounds = array<i64: 1, 1, 4>}]} {
    %c0_i32 = arith.constant 0 : i32
    %0 = arith.cmpi eq, %arg1, %c0_i32 : i32
    %1 = arith.extui %0 : i1 to i32
    %c0_i32_0 = arith.constant 0 : i32
    %2 = arith.cmpi ne, %1, %c0_i32_0 : i32
    scf.if %2 {
      %cst_12 = arith.constant 0.000000e+00 : f32
      %14 = vector.broadcast %cst_12 : f32 to vector<1x4xf32>
      %c0_13 = arith.constant 0 : index
      %c0_14 = arith.constant 0 : index
      %15 = vector.load %arg5[%c0_13, %c0_14] : memref<1x4xf32, #tpu.memory_space<vmem>>, vector<1x4xf32>
      tpu.vector_store %arg5[%c0_13, %c0_14], %14 {strides = array<i32>} : memref<1x4xf32, #tpu.memory_space<vmem>>, vector<1x4xf32>,
    } else {
    }
    %c0 = arith.constant 0 : index
    %c0_1 = arith.constant 0 : index
    %c0_2 = arith.constant 0 : index
    %3 = vector.load %arg2[%c0, %c0_1, %c0_2] : memref<1x4x256xf32, #tpu.memory_space<vmem>>, vector<1x4x256xf32>
    %c0_3 = arith.constant 0 : index
    %c0_4 = arith.constant 0 : index
    %c0_5 = arith.constant 0 : index
    %4 = vector.load %arg3[%c0_3, %c0_4, %c0_5] : memref<1x1x256xf32, #tpu.memory_space<vmem>>, vector<1x1x256xf32>
    %5 = vector.broadcast %4 : vector<1x1x256xf32> to vector<1x4x256xf32>
    %6 = arith.mulf %3, %5 : vector<1x4x256xf32>
    %c0_6 = arith.constant 0 : index
    %c0_7 = arith.constant 0 : index
    %7 = vector.load %arg5[%c0_6, %c0_7] : memref<1x4xf32, #tpu.memory_space<vmem>>, vector<1x4xf32>
    %cst = arith.constant dense<0.000000e+00> : vector<1x4xf32>
    %8 = vector.multi_reduction <add>, %6, %cst [2] : vector<1x4x256xf32> to vector<1x4xf32>
    %9 = arith.addf %7, %8 : vector<1x4xf32>
    %c0_8 = arith.constant 0 : index
    %c0_9 = arith.constant 0 : index
    %10 = vector.load %arg5[%c0_8, %c0_9] : memref<1x4xf32, #tpu.memory_space<vmem>>, vector<1x4xf32>
    tpu.vector_store %arg5[%c0_8, %c0_9], %9 {strides = array<i32>} : memref<1x4xf32, #tpu.memory_space<vmem>>, vector<1x4xf32>,
    %c0_i32_10 = arith.constant 0 : i32
    %11 = arith.cmpi eq, %arg1, %c0_i32_10 : i32
    %12 = arith.extui %11 : i1 to i32
    %c0_i32_11 = arith.constant 0 : i32
    %13 = arith.cmpi ne, %12, %c0_i32_11 : i32
    scf.if %13 {
      %c0_12 = arith.constant 0 : index
      %c0_13 = arith.constant 0 : index
      %14 = vector.load %arg5[%c0_12, %c0_13] : memref<1x4xf32, #tpu.memory_space<vmem>>, vector<1x4xf32>
      %15 = vector.shape_cast %14 : vector<1x4xf32> to vector<1x1x4xf32>
      %c0_14 = arith.constant 0 : index
      %c0_15 = arith.constant 0 : index
      %c0_16 = arith.constant 0 : index
      %16 = vector.load %arg4[%c0_14, %c0_15, %c0_16] : memref<1x1x4xf32, #tpu.memory_space<vmem>>, vector<1x1x4xf32>
      tpu.vector_store %arg4[%c0_14, %c0_15, %c0_16], %15 {strides = array<i32>} : memref<1x1x4xf32, #tpu.memory_space<vmem>>, vector<1x1x4xf32>,
    } else {
    }
    return
  }
  func.func @transform_0(%arg0: i32, %arg1: i32) -> (i32, i32, i32) {
    %c0_i32 = arith.constant 0 : i32
    %c0_i32_0 = arith.constant 0 : i32
    return %arg0, %c0_i32, %arg1 : i32, i32, i32
  }
  func.func @transform_1(%arg0: i32, %arg1: i32) -> (i32, i32, i32) {
    %c0_i32 = arith.constant 0 : i32
    %c0_i32_0 = arith.constant 0 : i32
    return %arg0, %c0_i32, %arg1 : i32, i32, i32
  }
  func.func @transform_2(%arg0: i32, %arg1: i32) -> (i32, i32, i32) {
    %c0_i32 = arith.constant 0 : i32
    %c0_i32_0 = arith.constant 0 : i32
    %c0_i32_1 = arith.constant 0 : i32
    return %arg0, %c0_i32, %c0_i32_0 : i32, i32, i32
  }
}

</mosaic_0001>

<llo_original>
// kernel: tpu_custom_call.1
$region0: #{tpu_custom_call.1}
  #allocation0 [shape = 'u32[]', space=smem, size = 0x4, offset = 0x4, fixed_abs, tag = 'smem constant byte address 0x4 - core index']
  #allocation1 [shape = 'u32[72,128]{1,0:T(1,128)}', space=vmem, size = 0x9000, scoped, tag = 'internal scratch']
  #allocation2 [shape = 'f32[1,4]{1,0:T(1,128)}', space=vmem, size = 0x200, scoped, tag = 'scratch operand']
  %s0 = inlined_call_operand.hbm [shape: f32[2,4,256], index: 0, kind: input, shape index: {}]
  %s1 = inlined_call_operand.hbm [shape: f32[2,1,256], index: 1, kind: input, shape index: {}]
  %s2 = inlined_call_operand.hbm [shape: f32[2,1,4], index: 2, kind: output, shape index: {}]
  %s3 = sld [smem:[#allocation0]]
  $region57: #{tpu_custom_call.1} parent=0
    _
  %s5 = ssub.s32 1, %s3
  %s6 = scalar_select 0, %s5, %s3
  $region1: #{tpu_custom_call.1} parent=0
    #allocation3 [shape = 'u8[8192]{0}', space=vmem, size = 0x2000, scoped, tag = 'input window, operand 0']
    #allocation4 [shape = 's32[2]{0}', space=sflag, size = 0x8, scoped, tag = 'scoped memory for tpu_custom_call.1']
    #allocation5 [shape = 's32[2]{0}', space=sflag, size = 0x8, scoped, tag = 'scoped memory for tpu_custom_call.1']
    #allocation6 [shape = 'u8[2048]{0}', space=vmem, size = 0x800, scoped, tag = 'input window, operand 1']
    #allocation7 [shape = 's32[2]{0}', space=sflag, size = 0x8, scoped, tag = 'scoped memory for tpu_custom_call.1']
    #allocation8 [shape = 'u8[1024]{0}', space=vmem, size = 0x400, scoped, tag = 'output window, operand 0']
    %7 = vsyncpa [#allocation4], 0
    %s8 = scalar_lea.sflag [#allocation4], 1
    %9 = vsyncpa %s8, 0
    %10 = vsyncpa [#allocation7], 0
    %s11 = scalar_lea.sflag [#allocation7], 1
    %12 = vsyncpa %s11, 0
    %13 = vsyncpa [#allocation5], 0
    %s14 = scalar_lea.sflag [#allocation5], 1
    %15 = vsyncpa %s14, 0
    loop: start=0, step=1, limit=4
    $region2: #{tpu_custom_call.1} parent=1 // loop_pre_header
      _
    $region3: #{tpu_custom_call.1} parent=1 // loop_header
      %s17 = sphi 0, %s21
      %p18 = scmp.ge.s32.totalorder %s17, 4
      %s24 = sphi 0, %s36
      %s25 = sphi 0, %s32
      %s26 = sphi 0, %s24
      %s27 = sphi 0, %s25
      %s28 = sphi 0, %s26
      %s29 = sphi 0, %s27
      %s41 = sphi 0, %s43
      %s44 = sphi 0, %s41
      %s45 = sphi 0, %s44
      %s61 = sphi 0, %s45
      %s69 = sphi 0, %s71
      %s72 = sphi 0, %s69
      %s73 = sphi 0, %s72
      %s89 = sphi 0, %s73
      %s95 = sphi 0, %s97
      %s98 = sphi 0, %s95
      %s99 = sphi 0, %s98
      %s115 = sphi 0, %s99
    $region4: #{tpu_custom_call.1} parent=1 // loop_header_branch
      %20 = sbr.rel (%p18) target = $region8
    $region5: #{tpu_custom_call.1} parent=1 // loop_body
      %s22 = ssub.s32 %s17, 1
      %s23 = ssub.s32 %s17, 2
      %s30 = sadd.s32 1, %s25
      %p31 = scmp.ge.s32.totalorder %s30, 1
      %s32 = scalar_select %p31, 0, %s30
      %s33 = sadd.s32 1, %s24
      %s34 = scalar_select %p31, %s33, %s24
      %p35 = scmp.ge.s32.totalorder %s34, 2
      %s36 = scalar_select %p35, 0, %s34
      %s37 = ssub.s32 %s24, %s36
      %s38 = ssub.s32 %s25, %s32
      %s39 = sor.u32 %s37, %s38
      %p40 = scmp.eq.s32.totalorder %s39, 0
      %s42 = sadd.s32 %s41, 1
      %s43 = scalar_select %p40, %s41, %s42
      %p46 = pneg %p40
      %p47 = scmp.eq.s32.totalorder %s17, 1
      %p48 = por %p46, %p47
      %p49 = scmp.ne.s32.totalorder %s41, %s44
      %p50 = scmp.eq.s32.totalorder %s17, 0
      %p51 = por %p49, %p50
      %p52 = scmp.ne.s32.totalorder %s41, %s44
      %p53 = scmp.eq.s32.totalorder %s22, 1
      %p54 = por %p52, %p53
      %p55 = scmp.ne.s32.totalorder %s44, %s45
      %p56 = scmp.eq.s32.totalorder %s22, 0
      %p57 = por %p55, %p56
      %p58 = scmp.ne.s32.totalorder %s44, %s45
      %p59 = scmp.eq.s32.totalorder %s23, 1
      %p60 = por %p58, %p59
      %p62 = scmp.ne.s32.totalorder %s45, %s61
      %p63 = scmp.eq.s32.totalorder %s23, 0
      %p64 = por %p62, %p63
      %s65 = ssub.s32 %s24, %s36
      %s66 = ssub.s32 %s25, %s32
      %s67 = sor.u32 %s65, %s66
      %p68 = scmp.eq.s32.totalorder %s67, 0
      %s70 = sadd.s32 %s69, 1
      %s71 = scalar_select %p68, %s69, %s70
      %p74 = pneg %p68
      %p75 = scmp.eq.s32.totalorder %s17, 1
      %p76 = por %p74, %p75
      %p77 = scmp.ne.s32.totalorder %s69, %s72
      %p78 = scmp.eq.s32.totalorder %s17, 0
      %p79 = por %p77, %p78
      %p80 = scmp.ne.s32.totalorder %s69, %s72
      %p81 = scmp.eq.s32.totalorder %s22, 1
      %p82 = por %p80, %p81
      %p83 = scmp.ne.s32.totalorder %s72, %s73
      %p84 = scmp.eq.s32.totalorder %s22, 0
      %p85 = por %p83, %p84
      %p86 = scmp.ne.s32.totalorder %s72, %s73
      %p87 = scmp.eq.s32.totalorder %s23, 1
      %p88 = por %p86, %p87
      %p90 = scmp.ne.s32.totalorder %s73, %s89
      %p91 = scmp.eq.s32.totalorder %s23, 0
      %p92 = por %p90, %p91
      %s93 = ssub.s32 %s24, %s36
      %p94 = scmp.eq.s32.totalorder %s93, 0
      %s96 = sadd.s32 %s95, 1
      %s97 = scalar_select %p94, %s95, %s96
      %p100 = pneg %p94
      %p101 = scmp.eq.s32.totalorder %s17, 1
      %p102 = por %p100, %p101
      %p103 = scmp.ne.s32.totalorder %s95, %s98
      %p104 = scmp.eq.s32.totalorder %s17, 0
      %p105 = por %p103, %p104
      %p106 = scmp.ne.s32.totalorder %s95, %s98
      %p107 = scmp.eq.s32.totalorder %s22, 1
      %p108 = por %p106, %p107
      %p109 = scmp.ne.s32.totalorder %s98, %s99
      %p110 = scmp.eq.s32.totalorder %s22, 0
      %p111 = por %p109, %p110
      %p112 = scmp.ne.s32.totalorder %s98, %s99
      %p113 = scmp.eq.s32.totalorder %s23, 1
      %p114 = por %p112, %p113
      %p116 = scmp.ne.s32.totalorder %s99, %s115
      %p117 = scmp.eq.s32.totalorder %s23, 0
      %p118 = por %p116, %p117
      %p119 = scmp.le.s32.totalorder 1, %s17
      %p120 = scmp.lt.s32.totalorder %s17, 3
      %p121 = pnand %p119, %p120
      %p122 = pneg %p121
      // Predicated region
      $region9: #{tpu_custom_call.1} parent=5 // pred_check
        _
      $region10: #{tpu_custom_call.1} parent=5 // pred_check_branch
        %124 = sbr.rel (%p121) target = $region12
      $region11: #{tpu_custom_call.1} parent=5 // pred_region
        %s125 = ssub.s32 %s17, 1
      $region12: #{tpu_custom_call.1} parent=5 // pred_fallthru
        _
      %p126 = scmp.lt.s32.totalorder %s17, 2
      // Predicated region
      $region13: #{tpu_custom_call.1} parent=5 // pred_check
        %p127 = pneg %p126
      $region14: #{tpu_custom_call.1} parent=5 // pred_check_branch
        %129 = sbr.rel (%p127) target = $region16
      $region15: #{tpu_custom_call.1} parent=5 // pred_region
        // Predicated region
        $region17: #{tpu_custom_call.1} parent=15 // pred_check
          %p130 = pneg %p51
        $region18: #{tpu_custom_call.1} parent=15 // pred_check_branch
          %132 = sbr.rel (%p130) target = $region20
        $region19: #{tpu_custom_call.1} parent=15 // pred_region
          %s133 = sand.u32 %s41, 1
          %s134 = scalar_lea.sflag [#allocation4], %s133
          %s135 = sand.u32 %s41, 1
          %s136 = smul.addr %s135, 8
          %s137 = scalar_lea.vmem [#allocation3], %s136
          %s138 = smul.u32 2, %s25
          %140 = vsyncadd %s134, 0
          %s141 = smul.addr %s24, 2
          %s142 = sadd.s32 %s138, %s141
          %s143 = smul.addr %s142, 4
          %s144 = scalar_lea.hbm %s0, %s143
          %s146 = sshll.u32 %s144, 4
          %s147 = int_to_ptr.hbm [resolvable:$true] %s146
          %s148 = sshll.u32 %s137, 4
          %s149 = int_to_ptr.vmem [resolvable:$true] %s148
          %151 = dma.hbm_to_vmem [thread:$0]  %s147, 128, %s149, %s134
        $region20: #{tpu_custom_call.1} parent=15 // pred_fallthru
          _
        // Predicated region
        $region21: #{tpu_custom_call.1} parent=15 // pred_check
          %p152 = pneg %p79
        $region22: #{tpu_custom_call.1} parent=15 // pred_check_branch
          %154 = sbr.rel (%p152) target = $region24
        $region23: #{tpu_custom_call.1} parent=15 // pred_region
          %s155 = sand.u32 %s69, 1
          %s156 = scalar_lea.sflag [#allocation7], %s155
          %s157 = sand.u32 %s69, 1
          %s158 = smul.addr %s157, 2
          %s159 = scalar_lea.vmem [#allocation6], %s158
          %s160 = smul.u32 2, %s25
          %162 = vsyncadd %s156, 0
          %s163 = smul.addr %s24, 2
          %s164 = sadd.s32 %s160, %s163
          %s165 = scalar_lea.hbm %s1, %s164
          %s167 = sshll.u32 %s165, 4
          %s168 = int_to_ptr.hbm [resolvable:$true] %s167
          %s169 = sshll.u32 %s159, 4
          %s170 = int_to_ptr.vmem [resolvable:$true] %s169
          %172 = dma.hbm_to_vmem [thread:$0]  %s168, 32, %s170, %s156
        $region24: #{tpu_custom_call.1} parent=15 // pred_fallthru
          _
      $region16: #{tpu_custom_call.1} parent=5 // pred_fallthru
        _
      %p173 = scmp.le.s32.totalorder 1, %s17
      %p174 = scmp.lt.s32.totalorder %s17, 3
      %p175 = pnand %p173, %p174
      %p176 = pneg %p175
      // Predicated region
      $region25: #{tpu_custom_call.1} parent=5 // pred_check
        _
      $region26: #{tpu_custom_call.1} parent=5 // pred_check_branch
        %178 = sbr.rel (%p175) target = $region28
      $region27: #{tpu_custom_call.1} parent=5 // pred_region
        %s179 = ssub.s32 %s17, 1
        %s180 = sand.u32 %s44, 1
        %s181 = scalar_lea.sflag [#allocation4], %s180
        %s182 = sand.u32 %s44, 1
        %s183 = smul.addr %s182, 8
        %s184 = scalar_lea.vmem [#allocation3], %s183
        // Predicated region
        $region29: #{tpu_custom_call.1} parent=27 // pred_check
          %p185 = pneg %p57
        $region30: #{tpu_custom_call.1} parent=27 // pred_check_branch
          %187 = sbr.rel (%p185) target = $region32
        $region31: #{tpu_custom_call.1} parent=27 // pred_region
          %189 = dma.done %s181, 128
        $region32: #{tpu_custom_call.1} parent=27 // pred_fallthru
          _
        %s190 = sand.u32 %s72, 1
        %s191 = scalar_lea.sflag [#allocation7], %s190
        %s192 = sand.u32 %s72, 1
        %s193 = smul.addr %s192, 2
        %s194 = scalar_lea.vmem [#allocation6], %s193
        // Predicated region
        $region33: #{tpu_custom_call.1} parent=27 // pred_check
          %p195 = pneg %p85
        $region34: #{tpu_custom_call.1} parent=27 // pred_check_branch
          %197 = sbr.rel (%p195) target = $region36
        $region35: #{tpu_custom_call.1} parent=27 // pred_region
          %199 = dma.done %s191, 32
        $region36: #{tpu_custom_call.1} parent=27 // pred_fallthru
          _
        %s200 = sand.u32 %s44, 1
        %s201 = scalar_lea.sflag [#allocation4], %s200
        %s202 = sand.u32 %s44, 1
        %s203 = smul.addr %s202, 8
        %s204 = scalar_lea.vmem [#allocation3], %s203
        %p205 = pneg %p57
        %p206 = pneg %p54
        %s207 = sand.u32 %s72, 1
        %s208 = scalar_lea.sflag [#allocation7], %s207
        %s209 = sand.u32 %s72, 1
        %s210 = smul.addr %s209, 2
        %s211 = scalar_lea.vmem [#allocation6], %s210
        %p212 = pneg %p85
        %p213 = pneg %p82
        %p214 = pneg %p111
        %p215 = pneg %p108
        %s216 = sand.u32 %s98, 1
        %s217 = scalar_lea.sflag [#allocation5], %s216
        %s218 = sand.u32 %s98, 1
        %s219 = scalar_lea.vmem [#allocation8], %s218
        %s220 = smul.u32 2, %s27
        %s221 = smul.u32 2, %s27
        %p222 = scmp.eq.s32.totalorder %s27, 0
        // Predicated region
        $region37: #{tpu_custom_call.1} parent=27 // pred_check
          %p223 = pneg %p222
        $region38: #{tpu_custom_call.1} parent=27 // pred_check_branch
          %225 = sbr.rel (%p223) target = $region40
        $region39: #{tpu_custom_call.1} parent=27 // pred_region
          %vm226 = vcmask 24576
          %227 = vst.msk [vmem:[#allocation2] sm:$0x1] %vm226, 0.0
        $region40: #{tpu_custom_call.1} parent=27 // pred_fallthru
          _
        %v228 = vld [vmem:[%s184] sm:$0xff]
        %v229 = vld [vmem:[%s194] sm:$0x3]
        %v231 = vperm.slane %v229, 0
        %v232 = vperm.slane %v229, 1
        %v233 = vrot.slane %v232, 4
        %vm234 = vcmask 1043456
        %v235 = vsel %vm234, %v231, %v233
        %v237 = vmul.f32 %v228, %v235
        %v238 = vld [vmem:[#allocation2] sm:$0x1]
        %240 = vst [vmem:[#allocation1] ss:$2 sm:$0xff] %v237
        %v241 = vld.sshfl [vmem:[#allocation1] sm:$0xff pattern:$0x75316420]
        %v242 = vld.sshfl [vmem:[#allocation1 + $0x8] sm:$0xff pattern:$0x75316420]
        %v245 = vsel %vm234, %v241, 0.0
        %v246 = vsel %vm234, %v242, 0.0
        %v247 = vadd.f32 %v245, %v246
        %248 = vadd.xlane.f32.xlu0 %v247
        %v249 = vpop.xlane.xlu0 %248
        %v251 = vperm.slane %v249, 0
        %v252 = vperm.slane %v249, 1
        %v253 = vperm.slane %v249, 2
        %v254 = vperm.slane %v249, 3
        %255 = vst [vmem:[#allocation1] ss:$9 sm:$0xff] %v251
        %s256 = scalar_lea.vmem [#allocation1], 1
        %257 = vst [vmem:[%s256] ss:$9 sm:$0xff] %v252
        %s258 = scalar_lea.vmem [#allocation1], 2
        %259 = vst [vmem:[%s258] ss:$9 sm:$0xff] %v253
        %s260 = scalar_lea.vmem [#allocation1], 3
        %261 = vst [vmem:[%s260] ss:$9 sm:$0xff] %v254
        %v262 = vld [vmem:[#allocation1] sm:$0xff]
        %263 = vset.pattern.permute.xlu0 0
        %264 = vperm.xlu0 %263, %v262
        %v265 = vpop.permute.xlu0 %264
        %v266 = vlaneseq
        %v267 = vand.u32 %v266, 127
        %v268 = vperm.slane %v265, %v267
        %v270 = vadd.f32 %v238, %v268
        %vm271 = vcmask 24576
        %272 = vst.msk [vmem:[#allocation2] sm:$0x1] %vm271, %v270
        // Predicated region
        $region41: #{tpu_custom_call.1} parent=27 // pred_check
          %p273 = pneg %p222
        $region42: #{tpu_custom_call.1} parent=27 // pred_check_branch
          %275 = sbr.rel (%p273) target = $region44
        $region43: #{tpu_custom_call.1} parent=27 // pred_region
          %v276 = vld [vmem:[#allocation2] sm:$0x1]
          %277 = vst.msk [vmem:[%s219] sm:$0x1] %vm271, %v276
        $region44: #{tpu_custom_call.1} parent=27 // pred_fallthru
          _
        %s278 = sand.u32 %s98, 1
        %s279 = scalar_lea.sflag [#allocation5], %s278
        %s280 = sand.u32 %s98, 1
        %s281 = scalar_lea.vmem [#allocation8], %s280
        // Predicated region
        $region45: #{tpu_custom_call.1} parent=27 // pred_check
          %p282 = pneg %p108
        $region46: #{tpu_custom_call.1} parent=27 // pred_check_branch
          %284 = sbr.rel (%p282) target = $region48
        $region47: #{tpu_custom_call.1} parent=27 // pred_region
          %286 = vsyncadd %s279, 0
          %s287 = scalar_lea.hbm %s2, %s26
          %s289 = sshll.u32 %s281, 4
          %s290 = int_to_ptr.vmem [resolvable:$true] %s289
          %s291 = sshll.u32 %s287, 4
          %s292 = int_to_ptr.hbm [resolvable:$true] %s291
          %294 = dma.vmem_to_hbm [thread:$0]  %s290, 16, %s292, %s279
        $region48: #{tpu_custom_call.1} parent=27 // pred_fallthru
          _
      $region28: #{tpu_custom_call.1} parent=5 // pred_fallthru
        _
      %p295 = scmp.le.s32.totalorder 2, %s17
      // Predicated region
      $region49: #{tpu_custom_call.1} parent=5 // pred_check
        %p296 = pneg %p295
      $region50: #{tpu_custom_call.1} parent=5 // pred_check_branch
        %298 = sbr.rel (%p296) target = $region52
      $region51: #{tpu_custom_call.1} parent=5 // pred_region
        %s299 = ssub.s32 %s17, 2
        // Predicated region
        $region53: #{tpu_custom_call.1} parent=51 // pred_check
          %p300 = pneg %p114
        $region54: #{tpu_custom_call.1} parent=51 // pred_check_branch
          %302 = sbr.rel (%p300) target = $region56
        $region55: #{tpu_custom_call.1} parent=51 // pred_region
          %s303 = sand.u32 %s99, 1
          %s304 = scalar_lea.sflag [#allocation5], %s303
          %s305 = sand.u32 %s99, 1
          %s306 = scalar_lea.vmem [#allocation8], %s305
          %308 = dma.done %s304, 16
        $region56: #{tpu_custom_call.1} parent=51 // pred_fallthru
          _
      $region52: #{tpu_custom_call.1} parent=5 // pred_fallthru
        _
    $region6: #{tpu_custom_call.1} parent=1 // loop_footer
      %s21 = sadd.s32 1, %s17
    $region7: #{tpu_custom_call.1} parent=1 // loop_footer_branch
      %16 = sbr.rel target = $region3
    $region8: #{tpu_custom_call.1} parent=1 // loop_exit
      _
    %309 = vsyncpa [#allocation4], 1
    %s310 = scalar_lea.sflag [#allocation4], 1
    %311 = vsyncpa %s310, 1
    %312 = vsyncpa [#allocation7], 1
    %s313 = scalar_lea.sflag [#allocation7], 1
    %314 = vsyncpa %s313, 1
    %315 = vsyncpa [#allocation5], 1
    %s316 = scalar_lea.sflag [#allocation5], 1
    %317 = vsyncpa %s316, 1

</llo_original>
